<compile_context>
chip_gen: v5e
topology: v5e:2x2
jax: 0.10.0
libtpu: 0.0.40
codegen_flags: <defaults>
</compile_context>

<pallas_src>
import jax
import jax.numpy as jnp
from jax.experimental import pallas as pl

# Module hyper-parameters (from Normalize.__init__ defaults).
P = 2
DIM = 1
EPS = 1e-12


def _normalize_kernel(x_ref, o_ref):
    x = x_ref[...]                                   # (N, D) f32 in VMEM
    xsq = x * x                                      # explicit square -> VPU only

    # Row reduction on the idle MXU: (N, D) @ (D, 1) -> (N, 1).
    ones = jnp.ones((x.shape[1], 1), dtype=jnp.float32)
    s_col = jnp.dot(xsq, ones, preferred_element_type=jnp.float32)   # (N, 1)

    # Narrow flip so row index j lands on the lane axis: (N, 1) -> (1, N).
    s = jnp.transpose(s_col)                         # (1, N)

    # 1 / max(sqrt(s), eps)  ==  min(rsqrt(s), 1/eps)   (exact; rsqrt(0)=inf clamps)
    inv = jnp.minimum(jax.lax.rsqrt(s), 1.0 / EPS)   # (1, N): one vreg of EUP work

    # expand_as / right-aligned broadcast: norm of row j scales column j.
    o_ref[...] = x * inv                             # (N, D) * (1, N==D) on the VPU


def normalize(x):
    """Pallas implementation of Normalize(p=2, dim=1, eps=1e-12).forward(x)."""
    assert x.ndim == 2 and DIM == 1
    n, d = x.shape
    # torch's .expand_as only works for these shapes; we keep the same contract.
    assert n == d or n == 1, "torch.expand_as would fail for this shape"
    return pl.pallas_call(
        _normalize_kernel,
        out_shape=jax.ShapeDtypeStruct((n, d), x.dtype),
        # grid=() / no BlockSpecs: whole arrays resident in VMEM, no pipeline
        # bookkeeping or pointless double-buffering for this tiny op.
        cost_estimate=pl.CostEstimate(
            flops=4 * n * d,            # square + reduce-matmul + final multiply
            transcendentals=n,          # one rsqrt per row
            bytes_accessed=2 * n * d * x.dtype.itemsize,
        ),
    )(x)


def _reference(x, p=P, dim=DIM, eps=EPS):
    # Pure-JAX mirror of the exact PyTorch code (jnp broadcasting == expand_as).
    normalized = jnp.clip(jnp.sum(x ** p, axis=dim) ** (1.0 / p), eps, None)
    return x / jnp.broadcast_to(normalized, x.shape)


if __name__ == "__main__":
    key = jax.random.PRNGKey(0)
    # Square input so the PyTorch module's expand_as is well defined; 128x128
    # keeps the output tile lane-dense (last dim multiple of 128).
    x = jax.random.normal(key, (128, 128), dtype=jnp.float32)

    out = normalize(x)
    jax.block_until_ready(out)

    ref = _reference(x)
    assert out.shape == x.shape and out.dtype == x.dtype
    assert jnp.allclose(out, ref, atol=1e-5, rtol=1e-5), "mismatch vs reference"

    print("KERNEL_OK")
</pallas_src>

<mosaic_0001>
module attributes {stable_mosaic.version = 11 : i64} {
  func.func @_normalize_kernel(%arg0: memref<128x128xf32, #tpu.memory_space<vmem>>, %arg1: memref<128x128xf32, #tpu.memory_space<vmem>>) attributes {dimension_semantics = [], scalar_prefetch = 0 : i64, scratch_operands = 0 : i64, tpu.core_type = #tpu.core_type<tc>} {
    %c0 = arith.constant 0 : index
    %c0_0 = arith.constant 0 : index
    %0 = vector.load %arg0[%c0, %c0_0] : memref<128x128xf32, #tpu.memory_space<vmem>>, vector<128x128xf32>
    %1 = arith.mulf %0, %0 : vector<128x128xf32>
    %cst = arith.constant 1.000000e+00 : f32
    %2 = vector.broadcast %cst : f32 to vector<128x1xf32>
    %cst_1 = arith.constant dense<0.000000e+00> : vector<128x1xf32>
    %3 = tpu.matmul %1, %2, %cst_1 {dimension_numbers = #tpu.dot_dimension_numbers<[1], [0], [0], [1], [0, 0, 1, 1], [], []>} : vector<128x128xf32>, vector<128x1xf32>, vector<128x1xf32> -> vector<128x1xf32>
    %4 = tpu.transpose %3, [1, 0] : vector<128x1xf32> -> vector<1x128xf32>
    %5 = math.rsqrt %4 : vector<1x128xf32>
    %cst_2 = arith.constant 9.99999995E+11 : f32
    %6 = vector.broadcast %cst_2 : f32 to vector<1x128xf32>
    %7 = arith.minimumf %5, %6 : vector<1x128xf32>
    %8 = vector.broadcast %7 : vector<1x128xf32> to vector<128x128xf32>
    %9 = arith.mulf %0, %8 : vector<128x128xf32>
    %c0_3 = arith.constant 0 : index
    %c0_4 = arith.constant 0 : index
    %10 = vector.load %arg1[%c0_3, %c0_4] : memref<128x128xf32, #tpu.memory_space<vmem>>, vector<128x128xf32>
    tpu.vector_store %arg1[%c0_3, %c0_4], %9 {strides = array<i32>} : memref<128x128xf32, #tpu.memory_space<vmem>>, vector<128x128xf32>,
    return
  }
}

</mosaic_0001>

<llo_original>
// kernel: tpu_custom_call.1
$region0: #{tpu_custom_call.1}
  #allocation0 [shape = 'u32[]', space=smem, size = 0x4, offset = 0x4, fixed_abs, tag = 'smem constant byte address 0x4 - core index']
  #allocation1 [shape = 'u32[72,128]{1,0:T(1,128)}', space=vmem, size = 0x9000, scoped, tag = 'internal scratch']
  %s0 = inlined_call_operand.hbm [shape: f32[128,128], index: 0, kind: input, shape index: {}]
  %s1 = inlined_call_operand.hbm [shape: f32[128,128], index: 1, kind: output, shape index: {}]
  %s2 = sld [smem:[#allocation0]]
  $region18: #{tpu_custom_call.1} parent=0
    _
  %s4 = ssub.s32 1, %s2
  %s5 = scalar_select 0, %s4, %s2
  $region1: #{tpu_custom_call.1} parent=0
    #allocation2 [shape = 'u8[65536]{0}', space=vmem, size = 0x10000, scoped, tag = 'input window, operand 0, single buffered']
    #allocation3 [shape = 's32[1]{0}', space=sflag, size = 0x4, scoped, tag = 'scoped memory for tpu_custom_call.1']
    #allocation4 [shape = 's32[1]{0}', space=sflag, size = 0x4, scoped, tag = 'scoped memory for tpu_custom_call.1']
    #allocation5 [shape = 'u8[65536]{0}', space=vmem, size = 0x10000, scoped, tag = 'output window, operand 0, single buffered']
    %6 = vsyncpa [#allocation3], 0
    %7 = vsyncpa [#allocation4], 0
    // Predicated region
    $region2: #{tpu_custom_call.1} parent=1 // pred_check
      _
    $region3: #{tpu_custom_call.1} parent=1 // pred_check_branch
      %9 = sbr.rel (0) target = $region5
    $region4: #{tpu_custom_call.1} parent=1 // pred_region
      %11 = vsyncadd [#allocation3], 0
      %s12 = sshll.u32 %s0, 4
      %s13 = int_to_ptr.hbm [resolvable:$true] %s12
      %s14 = sshll.u32 [#allocation2], 4
      %s15 = int_to_ptr.vmem [resolvable:$true] %s14
      %20 = dma.hbm_to_vmem [thread:$0]  %s13, 2048, %s15, [#allocation3], 128, 128, 8
    $region5: #{tpu_custom_call.1} parent=1 // pred_fallthru
      _
    // Predicated region
    $region6: #{tpu_custom_call.1} parent=1 // pred_check
      _
    $region7: #{tpu_custom_call.1} parent=1 // pred_check_branch
      %22 = sbr.rel (0) target = $region9
    $region8: #{tpu_custom_call.1} parent=1 // pred_region
      %24 = dma.done [#allocation3], 2048
    $region9: #{tpu_custom_call.1} parent=1 // pred_fallthru
      _
    %v25 = vld [vmem:[#allocation2] sm:$0xff]
    %v26 = vld [vmem:[#allocation2 + $0x8] sm:$0xff]
    %v27 = vld [vmem:[#allocation2 + $0x10] sm:$0xff]
    %v28 = vld [vmem:[#allocation2 + $0x18] sm:$0xff]
    %v29 = vld [vmem:[#allocation2 + $0x20] sm:$0xff]
    %v30 = vld [vmem:[#allocation2 + $0x28] sm:$0xff]
    %v31 = vld [vmem:[#allocation2 + $0x30] sm:$0xff]
    %v32 = vld [vmem:[#allocation2 + $0x38] sm:$0xff]
    %v33 = vld [vmem:[#allocation2 + $0x40] sm:$0xff]
    %v34 = vld [vmem:[#allocation2 + $0x48] sm:$0xff]
    %v35 = vld [vmem:[#allocation2 + $0x50] sm:$0xff]
    %v36 = vld [vmem:[#allocation2 + $0x58] sm:$0xff]
    %v37 = vld [vmem:[#allocation2 + $0x60] sm:$0xff]
    %v38 = vld [vmem:[#allocation2 + $0x68] sm:$0xff]
    %v39 = vld [vmem:[#allocation2 + $0x70] sm:$0xff]
    %v40 = vld [vmem:[#allocation2 + $0x78] sm:$0xff]
    %v41 = vmul.f32 %v25, %v25
    %v42 = vmul.f32 %v26, %v26
    %v43 = vmul.f32 %v27, %v27
    %v44 = vmul.f32 %v28, %v28
    %v45 = vmul.f32 %v29, %v29
    %v46 = vmul.f32 %v30, %v30
    %v47 = vmul.f32 %v31, %v31
    %v48 = vmul.f32 %v32, %v32
    %v49 = vmul.f32 %v33, %v33
    %v50 = vmul.f32 %v34, %v34
    %v51 = vmul.f32 %v35, %v35
    %v52 = vmul.f32 %v36, %v36
    %v53 = vmul.f32 %v37, %v37
    %v54 = vmul.f32 %v38, %v38
    %v55 = vmul.f32 %v39, %v39
    %v56 = vmul.f32 %v40, %v40
    %57 = vmatpush.msra.mxu0 1.0
    %58 = vmatpush.msra.mxu0 1.0
    %59 = vmatpush.msra.mxu0 1.0
    %60 = vmatpush.msra.mxu0 1.0
    %61 = vmatpush.msra.mxu0 1.0
    %62 = vmatpush.msra.mxu0 1.0
    %63 = vmatpush.msra.mxu0 1.0
    %64 = vmatpush.msra.mxu0 1.0
    %65 = vmatpush.msra.mxu0 1.0
    %66 = vmatpush.msra.mxu0 1.0
    %67 = vmatpush.msra.mxu0 1.0
    %68 = vmatpush.msra.mxu0 1.0
    %69 = vmatpush.msra.mxu0 1.0
    %70 = vmatpush.msra.mxu0 1.0
    %71 = vmatpush.msra.mxu0 1.0
    %72 = vmatpush.msra.mxu0 1.0
    %73 = vmatmul.f32.gmra.mxu0 %v41
    %v74 = vpop.f32.mrf.mxu0
    %v75 = vadd.f32 0.0, %v74
    %76 = vmatmul.f32.gmra.mxu0 %v42
    %v77 = vpop.f32.mrf.mxu0
    %v78 = vadd.f32 0.0, %v77
    %79 = vmatmul.f32.gmra.mxu0 %v43
    %v80 = vpop.f32.mrf.mxu0
    %v81 = vadd.f32 0.0, %v80
    %82 = vmatmul.f32.gmra.mxu0 %v44
    %v83 = vpop.f32.mrf.mxu0
    %v84 = vadd.f32 0.0, %v83
    %85 = vmatmul.f32.gmra.mxu0 %v45
    %v86 = vpop.f32.mrf.mxu0
    %v87 = vadd.f32 0.0, %v86
    %88 = vmatmul.f32.gmra.mxu0 %v46
    %v89 = vpop.f32.mrf.mxu0
    %v90 = vadd.f32 0.0, %v89
    %91 = vmatmul.f32.gmra.mxu0 %v47
    %v92 = vpop.f32.mrf.mxu0
    %v93 = vadd.f32 0.0, %v92
    %94 = vmatmul.f32.gmra.mxu0 %v48
    %v95 = vpop.f32.mrf.mxu0
    %v96 = vadd.f32 0.0, %v95
    %97 = vmatmul.f32.gmra.mxu0 %v49
    %v98 = vpop.f32.mrf.mxu0
    %v99 = vadd.f32 0.0, %v98
    %100 = vmatmul.f32.gmra.mxu0 %v50
    %v101 = vpop.f32.mrf.mxu0
    %v102 = vadd.f32 0.0, %v101
    %103 = vmatmul.f32.gmra.mxu0 %v51
    %v104 = vpop.f32.mrf.mxu0
    %v105 = vadd.f32 0.0, %v104
    %106 = vmatmul.f32.gmra.mxu0 %v52
    %v107 = vpop.f32.mrf.mxu0
    %v108 = vadd.f32 0.0, %v107
    %109 = vmatmul.f32.gmra.mxu0 %v53
    %v110 = vpop.f32.mrf.mxu0
    %v111 = vadd.f32 0.0, %v110
    %112 = vmatmul.f32.gmra.mxu0 %v54
    %v113 = vpop.f32.mrf.mxu0
    %v114 = vadd.f32 0.0, %v113
    %115 = vmatmul.f32.gmra.mxu0 %v55
    %v116 = vpop.f32.mrf.mxu0
    %v117 = vadd.f32 0.0, %v116
    %118 = vmatmul.f32.gmra.mxu0 %v56
    %v119 = vpop.f32.mrf.mxu0
    %v120 = vadd.f32 0.0, %v119
    %121 = vdwg.mxu0
    %122 = vxpose.xlu0.b32.start [1/16] %v75, 128
    %123 = vxpose.xlu0.b32.cont [2/16] %v78, 128
    %124 = vxpose.xlu0.b32.cont [3/16] %v81, 128
    %125 = vxpose.xlu0.b32.cont [4/16] %v84, 128
    %126 = vxpose.xlu0.b32.cont [5/16] %v87, 128
    %127 = vxpose.xlu0.b32.cont [6/16] %v90, 128
    %128 = vxpose.xlu0.b32.cont [7/16] %v93, 128
    %129 = vxpose.xlu0.b32.cont [8/16] %v96, 128
    %130 = vxpose.xlu0.b32.cont [9/16] %v99, 128
    %131 = vxpose.xlu0.b32.cont [10/16] %v102, 128
    %132 = vxpose.xlu0.b32.cont [11/16] %v105, 128
    %133 = vxpose.xlu0.b32.cont [12/16] %v108, 128
    %134 = vxpose.xlu0.b32.cont [13/16] %v111, 128
    %135 = vxpose.xlu0.b32.cont [14/16] %v114, 128
    %136 = vxpose.xlu0.b32.cont [15/16] %v117, 128
    %137 = vxpose.xlu0.b32.end [16/16] %v120, 128
    %v138 = vpop.trf.xlu0
    %v139 = vpop.trf.xlu0
    %v140 = vpop.trf.xlu0
    %v141 = vpop.trf.xlu0
    %v142 = vpop.trf.xlu0
    %v143 = vpop.trf.xlu0
    %v144 = vpop.trf.xlu0
    %v145 = vpop.trf.xlu0
    %v146 = vpop.trf.xlu0
    %v147 = vpop.trf.xlu0
    %v148 = vpop.trf.xlu0
    %v149 = vpop.trf.xlu0
    %v150 = vpop.trf.xlu0
    %v151 = vpop.trf.xlu0
    %v152 = vpop.trf.xlu0
    %v153 = vpop.trf.xlu0
    %v154 = vrsqrt.pop %v138
    %v155 = vmul.f32 %v154, %v138
    %v156 = vmul.f32 %v155, %v154
    %v157 = vmul.f32 0.5, %v156
    %v158 = vsub.f32 1.5, %v157
    %v159 = vmul.f32 %v154, %v158
    %vm160 = vweird.f32 %v138
    %vm161 = vweird.f32 %v154
    %vm162 = vmor %vm160, %vm161
    %v163 = vsel %vm162, %v154, %v159
    %v164 = vmin.f32 %v163, 1e+12
    %v165 = vperm.slane %v164, 0
    %v166 = vmul.f32 %v25, %v165
    %v167 = vmul.f32 %v26, %v165
    %v168 = vmul.f32 %v27, %v165
    %v169 = vmul.f32 %v28, %v165
    %v170 = vmul.f32 %v29, %v165
    %v171 = vmul.f32 %v30, %v165
    %v172 = vmul.f32 %v31, %v165
    %v173 = vmul.f32 %v32, %v165
    %v174 = vmul.f32 %v33, %v165
    %v175 = vmul.f32 %v34, %v165
    %v176 = vmul.f32 %v35, %v165
    %v177 = vmul.f32 %v36, %v165
    %v178 = vmul.f32 %v37, %v165
    %v179 = vmul.f32 %v38, %v165
    %v180 = vmul.f32 %v39, %v165
    %v181 = vmul.f32 %v40, %v165
    %182 = vst [vmem:[#allocation5] sm:$0xff] %v166
    %183 = vst [vmem:[#allocation5 + $0x8] sm:$0xff] %v167
    %184 = vst [vmem:[#allocation5 + $0x10] sm:$0xff] %v168
    %185 = vst [vmem:[#allocation5 + $0x18] sm:$0xff] %v169
    %186 = vst [vmem:[#allocation5 + $0x20] sm:$0xff] %v170
    %187 = vst [vmem:[#allocation5 + $0x28] sm:$0xff] %v171
    %188 = vst [vmem:[#allocation5 + $0x30] sm:$0xff] %v172
    %189 = vst [vmem:[#allocation5 + $0x38] sm:$0xff] %v173
    %190 = vst [vmem:[#allocation5 + $0x40] sm:$0xff] %v174
    %191 = vst [vmem:[#allocation5 + $0x48] sm:$0xff] %v175
    %192 = vst [vmem:[#allocation5 + $0x50] sm:$0xff] %v176
    %193 = vst [vmem:[#allocation5 + $0x58] sm:$0xff] %v177
    %194 = vst [vmem:[#allocation5 + $0x60] sm:$0xff] %v178
    %195 = vst [vmem:[#allocation5 + $0x68] sm:$0xff] %v179
    %196 = vst [vmem:[#allocation5 + $0x70] sm:$0xff] %v180
    %197 = vst [vmem:[#allocation5 + $0x78] sm:$0xff] %v181
    // Predicated region
    $region10: #{tpu_custom_call.1} parent=1 // pred_check
      _
    $region11: #{tpu_custom_call.1} parent=1 // pred_check_branch
      %199 = sbr.rel (0) target = $region13
    $region12: #{tpu_custom_call.1} parent=1 // pred_region
      %201 = vsyncadd [#allocation4], 0
      %s202 = sshll.u32 [#allocation5], 4
      %s203 = int_to_ptr.vmem [resolvable:$true] %s202
      %s204 = sshll.u32 %s1, 4
      %s205 = int_to_ptr.hbm [resolvable:$true] %s204
      %210 = dma.vmem_to_hbm [thread:$0]  %s203, 2048, %s205, [#allocation4], 128, 128, 8
    $region13: #{tpu_custom_call.1} parent=1 // pred_fallthru
      _
    // Predicated region
    $region14: #{tpu_custom_call.1} parent=1 // pred_check
      _
    $region15: #{tpu_custom_call.1} parent=1 // pred_check_branch
      %212 = sbr.rel (0) target = $region17
    $region16: #{tpu_custom_call.1} parent=1 // pred_region
      %214 = dma.done [#allocation4], 2048
    $region17: #{tpu_custom_call.1} parent=1 // pred_fallthru
      _
    %215 = vsyncpa [#allocation3], 1
    %216 = vsyncpa [#allocation4], 1

</llo_original>
